<compile_context>
chip_gen: v5e
topology: v5e:2x2
jax: 0.10.0
libtpu: 0.0.40
codegen_flags: <defaults>
</compile_context>

<pallas_src>
import jax
import jax.numpy as jnp
from jax.experimental import pallas as pl
from jax.experimental.pallas import tpu as pltpu

EPS = 1e-5
LANE = 128


def _round_up(n, m=LANE):
    return ((n + m - 1) // m) * m


def make_kernel(h1p, h2p, outp):
    """Kernel factory closing over the padded feature dims (static slices)."""

    def kernel(x_ref, w1_ref, w2_ref, w3_ref, vec_ref, o_ref):
        # x_ref / w*_ref are bf16 (MXU operands); vec_ref / BN math are f32.

        def bn_relu(h, g, be):
            # One-pass batch statistics (biased var, like PyTorch BN train mode),
            # folded into a single per-column scale/shift.
            mu = jnp.mean(h, axis=0, keepdims=True)                       # (1,H)
            ex2 = jnp.mean(h * h, axis=0, keepdims=True)                  # (1,H)
            var = jnp.maximum(ex2 - mu * mu, 0.0)                         # clamp cancellation
            scale = g * jax.lax.rsqrt(var + EPS)                          # (1,H) EUP rsqrt
            shift = be - mu * scale                                       # (1,H)
            return jnp.maximum(h * scale + shift, 0.0)                    # 2 VPU ops / elem

        # Packed (8, MAXP) f32 vector operand; rows: g1, be1, g2, be2, b3.
        g1 = vec_ref[0:1, :h1p]
        be1 = vec_ref[1:2, :h1p]
        g2 = vec_ref[2:3, :h2p]
        be2 = vec_ref[3:4, :h2p]
        b3 = vec_ref[4:5, :outp]

        # ---- layer1: Linear (bias dropped: cancelled by BN) -> BN -> ReLU ----
        h = jnp.dot(x_ref[...], w1_ref[...], preferred_element_type=jnp.float32)
        h = bn_relu(h, g1, be1)

        # ---- layer2: Linear (bias dropped) -> BN -> ReLU ----
        h = jnp.dot(h.astype(jnp.bfloat16), w2_ref[...],
                    preferred_element_type=jnp.float32)
        h = bn_relu(h, g2, be2)

        # ---- layer3: Linear (bias kept: no BN after it) ----
        o_ref[...] = (jnp.dot(h.astype(jnp.bfloat16), w3_ref[...],
                              preferred_element_type=jnp.float32)
                      + b3).astype(o_ref.dtype)

    return kernel


def prepare_params(params):
    """One-time padding / casting / packing of the parameters (hoisted out of
    the per-call path)."""
    (w1, b1, g1, be1, w2, b2, g2, be2, w3, b3) = params
    del b1, b2  # pre-BN Linear biases: exactly cancelled by train-mode BN mean subtraction

    in_dim, h1 = w1.shape
    h2 = w2.shape[1]
    out_dim = w3.shape[1]
    INP, H1P, H2P, OUTP = (_round_up(d) for d in (in_dim, h1, h2, out_dim))
    MAXP = max(H1P, H2P, OUTP)

    def pad_w(a, rows, cols):
        return jnp.pad(a, ((0, rows - a.shape[0]),
                           (0, cols - a.shape[1]))).astype(jnp.bfloat16)

    w1p = pad_w(w1, INP, H1P)
    w2p = pad_w(w2, H1P, H2P)
    w3p = pad_w(w3, H2P, OUTP)

    # Pack the five (1,H) f32 vectors into one (8, MAXP) tile-aligned operand.
    # Padded lanes are zero -> padded columns stay exactly 0 through BN/ReLU
    # (scale = 0*rsqrt(eps) = 0, shift = 0) and contribute nothing downstream.
    vec = jnp.zeros((8, MAXP), jnp.float32)
    vec = vec.at[0, :h1].set(g1[0])
    vec = vec.at[1, :h1].set(be1[0])
    vec = vec.at[2, :h2].set(g2[0])
    vec = vec.at[3, :h2].set(be2[0])
    vec = vec.at[4, :out_dim].set(b3[0])

    dims = dict(in_dim=in_dim, out_dim=out_dim,
                INP=INP, H1P=H1P, H2P=H2P, OUTP=OUTP)
    return (w1p, w2p, w3p, vec), dims


def build_forward(prepared, dims):
    """Returns a jitted forward(x) closing over the pre-padded parameters."""
    w1p, w2p, w3p, vec = prepared
    kernel = make_kernel(dims["H1P"], dims["H2P"], dims["OUTP"])
    INP, OUTP, out_dim = dims["INP"], dims["OUTP"], dims["out_dim"]

    @jax.jit
    def forward(x):
        B, in_dim = x.shape
        # Only x is padded/cast per call.
        xp = jnp.pad(x, ((0, 0), (0, INP - in_dim))).astype(jnp.bfloat16)
        args = (xp, w1p, w2p, w3p, vec)

        # Whole-array VMEM residency, no grid, no pipelining (B is tiny).
        out_padded = pl.pallas_call(
            kernel,
            out_shape=jax.ShapeDtypeStruct((B, OUTP), jnp.float32),
            in_specs=[pl.BlockSpec(memory_space=pltpu.MemorySpace.VMEM)
                      for _ in args],
            out_specs=pl.BlockSpec(memory_space=pltpu.MemorySpace.VMEM),
            compiler_params=pltpu.CompilerParams(
                vmem_limit_bytes=32 * 1024 * 1024),
        )(*args)
        return out_padded[:, :out_dim]

    return forward


def init_params(key, in_dim, n_hidden_1, n_hidden_2, out_dim):
    """PyTorch-style uniform fan-in init. Linear weights stored as (in, out)
    so the kernel does x @ W (== PyTorch x @ W.T). BN affine: gamma=1, beta=0."""
    ks = jax.random.split(key, 6)

    def linear(kw, kb, fan_in, fan_out):
        bound = 1.0 / jnp.sqrt(fan_in)
        w = jax.random.uniform(kw, (fan_in, fan_out), jnp.float32, -bound, bound)
        b = jax.random.uniform(kb, (1, fan_out), jnp.float32, -bound, bound)
        return w, b

    w1, b1 = linear(ks[0], ks[1], in_dim, n_hidden_1)
    w2, b2 = linear(ks[2], ks[3], n_hidden_1, n_hidden_2)
    w3, b3 = linear(ks[4], ks[5], n_hidden_2, out_dim)
    g1 = jnp.ones((1, n_hidden_1), jnp.float32)
    be1 = jnp.zeros((1, n_hidden_1), jnp.float32)
    g2 = jnp.ones((1, n_hidden_2), jnp.float32)
    be2 = jnp.zeros((1, n_hidden_2), jnp.float32)
    return (w1, b1, g1, be1, w2, b2, g2, be2, w3, b3)


def reference_forward(x, params):
    # Pure-JAX reference with true PyTorch forward semantics (biases INCLUDED,
    # two-pass variance), bf16 MXU operands / f32 accumulate to match the
    # kernel's matmul precision. The kernel drops b1/b2 (cancelled by BN), so
    # agreement here also validates that simplification.
    (w1, b1, g1, be1, w2, b2, g2, be2, w3, b3) = params

    def dot_bf16(a, w):
        return jnp.dot(a.astype(jnp.bfloat16), w.astype(jnp.bfloat16),
                       preferred_element_type=jnp.float32)

    def bn(h, g, be):
        mu = jnp.mean(h, axis=0, keepdims=True)
        var = jnp.mean((h - mu) ** 2, axis=0, keepdims=True)
        return (h - mu) * jax.lax.rsqrt(var + EPS) * g + be

    h = jnp.maximum(bn(dot_bf16(x, w1) + b1, g1, be1), 0.0)
    h = jnp.maximum(bn(dot_bf16(h, w2) + b2, g2, be2), 0.0)
    return dot_bf16(h, w3) + b3


if __name__ == "__main__":
    # Small shapes consistent with SimpleNet(in_dim, n_hidden_1, n_hidden_2, out_dim).
    B, in_dim, n_hidden_1, n_hidden_2, out_dim = 8, 32, 64, 32, 16

    key = jax.random.PRNGKey(0)
    kx, kp = jax.random.split(key)
    x = jax.random.normal(kx, (B, in_dim), jnp.float32)
    params = init_params(kp, in_dim, n_hidden_1, n_hidden_2, out_dim)

    prepared, dims = prepare_params(params)   # one-time pad/cast/pack (hoisted)
    forward = build_forward(prepared, dims)

    out = forward(x)
    out = jax.block_until_ready(out)

    ref = reference_forward(x, params)
    assert out.shape == (B, out_dim)
    assert jnp.allclose(out, ref, atol=1e-3, rtol=1e-3), "mismatch vs reference"

    print("KERNEL_OK")
</pallas_src>

<mosaic_0001>
module attributes {stable_mosaic.version = 11 : i64} {
  func.func @kernel(%arg0: memref<8x128xbf16, #tpu.memory_space<vmem>>, %arg1: memref<128x128xbf16, #tpu.memory_space<vmem>>, %arg2: memref<128x128xbf16, #tpu.memory_space<vmem>>, %arg3: memref<128x128xbf16, #tpu.memory_space<vmem>>, %arg4: memref<8x128xf32, #tpu.memory_space<vmem>>, %arg5: memref<8x128xf32, #tpu.memory_space<vmem>>) attributes {dimension_semantics = [], scalar_prefetch = 0 : i64, scratch_operands = 0 : i64, tpu.core_type = #tpu.core_type<tc>} {
    %c0 = arith.constant 0 : index
    %c0_0 = arith.constant 0 : index
    %0 = vector.load %arg4[%c0, %c0_0] : memref<8x128xf32, #tpu.memory_space<vmem>>, vector<1x128xf32>
    %c1 = arith.constant 1 : index
    %c0_1 = arith.constant 0 : index
    %1 = vector.load %arg4[%c1, %c0_1] : memref<8x128xf32, #tpu.memory_space<vmem>>, vector<1x128xf32>
    %c2 = arith.constant 2 : index
    %c0_2 = arith.constant 0 : index
    %2 = vector.load %arg4[%c2, %c0_2] : memref<8x128xf32, #tpu.memory_space<vmem>>, vector<1x128xf32>
    %c3 = arith.constant 3 : index
    %c0_3 = arith.constant 0 : index
    %3 = vector.load %arg4[%c3, %c0_3] : memref<8x128xf32, #tpu.memory_space<vmem>>, vector<1x128xf32>
    %c4 = arith.constant 4 : index
    %c0_4 = arith.constant 0 : index
    %4 = vector.load %arg4[%c4, %c0_4] : memref<8x128xf32, #tpu.memory_space<vmem>>, vector<1x128xf32>
    %c0_5 = arith.constant 0 : index
    %c0_6 = arith.constant 0 : index
    %5 = vector.load %arg0[%c0_5, %c0_6] : memref<8x128xbf16, #tpu.memory_space<vmem>>, vector<8x128xbf16>
    %c0_7 = arith.constant 0 : index
    %c0_8 = arith.constant 0 : index
    %6 = vector.load %arg1[%c0_7, %c0_8] : memref<128x128xbf16, #tpu.memory_space<vmem>>, vector<128x128xbf16>
    %cst = arith.constant dense<0.000000e+00> : vector<8x128xf32>
    %7 = tpu.matmul %5, %6, %cst {dimension_numbers = #tpu.dot_dimension_numbers<[1], [0], [0], [1], [0, 0, 1, 1], [], []>} : vector<8x128xbf16>, vector<128x128xbf16>, vector<8x128xf32> -> vector<8x128xf32>
    %cst_9 = arith.constant dense<0.000000e+00> : vector<128xf32>
    %8 = vector.multi_reduction <add>, %7, %cst_9 [0] : vector<8x128xf32> to vector<128xf32>
    %9 = vector.shape_cast %8 : vector<128xf32> to vector<1x128xf32>
    %cst_10 = arith.constant 8.000000e+00 : f32
    %10 = vector.broadcast %cst_10 : f32 to vector<1x128xf32>
    %11 = arith.divf %9, %10 : vector<1x128xf32>
    %12 = arith.mulf %7, %7 : vector<8x128xf32>
    %cst_11 = arith.constant dense<0.000000e+00> : vector<128xf32>
    %13 = vector.multi_reduction <add>, %12, %cst_11 [0] : vector<8x128xf32> to vector<128xf32>
    %14 = vector.shape_cast %13 : vector<128xf32> to vector<1x128xf32>
    %cst_12 = arith.constant 8.000000e+00 : f32
    %15 = vector.broadcast %cst_12 : f32 to vector<1x128xf32>
    %16 = arith.divf %14, %15 : vector<1x128xf32>
    %17 = arith.mulf %11, %11 : vector<1x128xf32>
    %18 = arith.subf %16, %17 : vector<1x128xf32>
    %cst_13 = arith.constant 0.000000e+00 : f32
    %19 = vector.broadcast %cst_13 : f32 to vector<1x128xf32>
    %20 = arith.maximumf %18, %19 : vector<1x128xf32>
    %cst_14 = arith.constant 9.99999974E-6 : f32
    %21 = vector.broadcast %cst_14 : f32 to vector<1x128xf32>
    %22 = arith.addf %20, %21 : vector<1x128xf32>
    %23 = math.rsqrt %22 : vector<1x128xf32>
    %24 = arith.mulf %0, %23 : vector<1x128xf32>
    %25 = arith.mulf %11, %24 : vector<1x128xf32>
    %26 = arith.subf %1, %25 : vector<1x128xf32>
    %27 = vector.broadcast %24 : vector<1x128xf32> to vector<8x128xf32>
    %28 = arith.mulf %7, %27 : vector<8x128xf32>
    %29 = vector.broadcast %26 : vector<1x128xf32> to vector<8x128xf32>
    %30 = arith.addf %28, %29 : vector<8x128xf32>
    %cst_15 = arith.constant 0.000000e+00 : f32
    %31 = vector.broadcast %cst_15 : f32 to vector<8x128xf32>
    %32 = arith.maximumf %30, %31 : vector<8x128xf32>
    %33 = arith.truncf %32 : vector<8x128xf32> to vector<8x128xbf16>
    %c0_16 = arith.constant 0 : index
    %c0_17 = arith.constant 0 : index
    %34 = vector.load %arg2[%c0_16, %c0_17] : memref<128x128xbf16, #tpu.memory_space<vmem>>, vector<128x128xbf16>
    %cst_18 = arith.constant dense<0.000000e+00> : vector<8x128xf32>
    %35 = tpu.matmul %33, %34, %cst_18 {dimension_numbers = #tpu.dot_dimension_numbers<[1], [0], [0], [1], [0, 0, 1, 1], [], []>} : vector<8x128xbf16>, vector<128x128xbf16>, vector<8x128xf32> -> vector<8x128xf32>
    %cst_19 = arith.constant dense<0.000000e+00> : vector<128xf32>
    %36 = vector.multi_reduction <add>, %35, %cst_19 [0] : vector<8x128xf32> to vector<128xf32>
    %37 = vector.shape_cast %36 : vector<128xf32> to vector<1x128xf32>
    %cst_20 = arith.constant 8.000000e+00 : f32
    %38 = vector.broadcast %cst_20 : f32 to vector<1x128xf32>
    %39 = arith.divf %37, %38 : vector<1x128xf32>
    %40 = arith.mulf %35, %35 : vector<8x128xf32>
    %cst_21 = arith.constant dense<0.000000e+00> : vector<128xf32>
    %41 = vector.multi_reduction <add>, %40, %cst_21 [0] : vector<8x128xf32> to vector<128xf32>
    %42 = vector.shape_cast %41 : vector<128xf32> to vector<1x128xf32>
    %cst_22 = arith.constant 8.000000e+00 : f32
    %43 = vector.broadcast %cst_22 : f32 to vector<1x128xf32>
    %44 = arith.divf %42, %43 : vector<1x128xf32>
    %45 = arith.mulf %39, %39 : vector<1x128xf32>
    %46 = arith.subf %44, %45 : vector<1x128xf32>
    %cst_23 = arith.constant 0.000000e+00 : f32
    %47 = vector.broadcast %cst_23 : f32 to vector<1x128xf32>
    %48 = arith.maximumf %46, %47 : vector<1x128xf32>
    %cst_24 = arith.constant 9.99999974E-6 : f32
    %49 = vector.broadcast %cst_24 : f32 to vector<1x128xf32>
    %50 = arith.addf %48, %49 : vector<1x128xf32>
    %51 = math.rsqrt %50 : vector<1x128xf32>
    %52 = arith.mulf %2, %51 : vector<1x128xf32>
    %53 = arith.mulf %39, %52 : vector<1x128xf32>
    %54 = arith.subf %3, %53 : vector<1x128xf32>
    %55 = vector.broadcast %52 : vector<1x128xf32> to vector<8x128xf32>
    %56 = arith.mulf %35, %55 : vector<8x128xf32>
    %57 = vector.broadcast %54 : vector<1x128xf32> to vector<8x128xf32>
    %58 = arith.addf %56, %57 : vector<8x128xf32>
    %cst_25 = arith.constant 0.000000e+00 : f32
    %59 = vector.broadcast %cst_25 : f32 to vector<8x128xf32>
    %60 = arith.maximumf %58, %59 : vector<8x128xf32>
    %61 = arith.truncf %60 : vector<8x128xf32> to vector<8x128xbf16>
    %c0_26 = arith.constant 0 : index
    %c0_27 = arith.constant 0 : index
    %62 = vector.load %arg3[%c0_26, %c0_27] : memref<128x128xbf16, #tpu.memory_space<vmem>>, vector<128x128xbf16>
    %cst_28 = arith.constant dense<0.000000e+00> : vector<8x128xf32>
    %63 = tpu.matmul %61, %62, %cst_28 {dimension_numbers = #tpu.dot_dimension_numbers<[1], [0], [0], [1], [0, 0, 1, 1], [], []>} : vector<8x128xbf16>, vector<128x128xbf16>, vector<8x128xf32> -> vector<8x128xf32>
    %64 = vector.broadcast %4 : vector<1x128xf32> to vector<8x128xf32>
    %65 = arith.addf %63, %64 : vector<8x128xf32>
    %c0_29 = arith.constant 0 : index
    %c0_30 = arith.constant 0 : index
    %66 = vector.load %arg5[%c0_29, %c0_30] : memref<8x128xf32, #tpu.memory_space<vmem>>, vector<8x128xf32>
    tpu.vector_store %arg5[%c0_29, %c0_30], %65 {strides = array<i32>} : memref<8x128xf32, #tpu.memory_space<vmem>>, vector<8x128xf32>,
    return
  }
}

</mosaic_0001>

<llo_original>
// kernel: forward.1
$region0: #{forward.1}
  #allocation0 [shape = 'u32[]', space=smem, size = 0x4, offset = 0x4, fixed_abs, tag = 'smem constant byte address 0x4 - core index']
  #allocation1 [shape = 'u32[72,128]{1,0:T(1,128)}', space=vmem, size = 0x9000, scoped, tag = 'internal scratch']
  %s0 = inlined_call_operand.vmem [shape: bf16[8,128], index: 0, kind: input, shape index: {}]
  %s1 = inlined_call_operand.hbm [shape: bf16[128,128], index: 1, kind: input, shape index: {}]
  %s2 = inlined_call_operand.hbm [shape: bf16[128,128], index: 2, kind: input, shape index: {}]
  %s3 = inlined_call_operand.hbm [shape: bf16[128,128], index: 3, kind: input, shape index: {}]
  %s4 = inlined_call_operand.vmem [shape: f32[8,128], index: 4, kind: input, shape index: {}]
  %s5 = inlined_call_operand.hbm [shape: f32[8,128], index: 5, kind: output, shape index: {}]
  %s6 = sld [smem:[#allocation0]]
  $region42: #{forward.1} parent=0
    _
  %s8 = ssub.s32 1, %s6
  %s9 = scalar_select 0, %s8, %s6
  $region1: #{forward.1} parent=0
    #allocation2 [shape = 'u8[32768]{0}', space=vmem, size = 0x8000, scoped, tag = 'input window, operand 1, single buffered']
    #allocation3 [shape = 's32[1]{0}', space=sflag, size = 0x4, scoped, tag = 'scoped memory for forward.1']
    #allocation4 [shape = 's32[1]{0}', space=sflag, size = 0x4, scoped, tag = 'scoped memory for forward.1']
    #allocation5 [shape = 'u8[32768]{0}', space=vmem, size = 0x8000, scoped, tag = 'input window, operand 2, single buffered']
    #allocation6 [shape = 's32[1]{0}', space=sflag, size = 0x4, scoped, tag = 'scoped memory for forward.1']
    #allocation7 [shape = 'u8[32768]{0}', space=vmem, size = 0x8000, scoped, tag = 'input window, operand 3, single buffered']
    #allocation8 [shape = 'u8[4096]{0}', space=vmem, size = 0x1000, scoped, tag = 'output window, operand 0, single buffered']
    %10 = vsyncpa [#allocation3], 0
    %11 = vsyncpa [#allocation6], 0
    %12 = vsyncpa [#allocation4], 0
    // Predicated region
    $region2: #{forward.1} parent=1 // pred_check
      _
    $region3: #{forward.1} parent=1 // pred_check_branch
      %14 = sbr.rel (0) target = $region5
    $region4: #{forward.1} parent=1 // pred_region
      _
    $region5: #{forward.1} parent=1 // pred_fallthru
      _
    // Predicated region
    $region6: #{forward.1} parent=1 // pred_check
      _
    $region7: #{forward.1} parent=1 // pred_check_branch
      %16 = sbr.rel (0) target = $region9
    $region8: #{forward.1} parent=1 // pred_region
      %18 = vsyncadd [#allocation3], 0
      %s19 = sshll.u32 %s1, 4
      %s20 = int_to_ptr.hbm [resolvable:$true] %s19
      %s21 = sshll.u32 [#allocation2], 4
      %s22 = int_to_ptr.vmem [resolvable:$true] %s21
      %27 = dma.hbm_to_vmem [thread:$0]  %s20, 1024, %s22, [#allocation3], 64, 64, 4
    $region9: #{forward.1} parent=1 // pred_fallthru
      _
    // Predicated region
    $region10: #{forward.1} parent=1 // pred_check
      _
    $region11: #{forward.1} parent=1 // pred_check_branch
      %29 = sbr.rel (0) target = $region13
    $region12: #{forward.1} parent=1 // pred_region
      %31 = vsyncadd [#allocation6], 0
      %s32 = sshll.u32 %s2, 4
      %s33 = int_to_ptr.hbm [resolvable:$true] %s32
      %s34 = sshll.u32 [#allocation5], 4
      %s35 = int_to_ptr.vmem [resolvable:$true] %s34
      %40 = dma.hbm_to_vmem [thread:$0]  %s33, 1024, %s35, [#allocation6], 64, 64, 4
    $region13: #{forward.1} parent=1 // pred_fallthru
      _
    // Predicated region
    $region14: #{forward.1} parent=1 // pred_check
      _
    $region15: #{forward.1} parent=1 // pred_check_branch
      %42 = sbr.rel (0) target = $region17
    $region16: #{forward.1} parent=1 // pred_region
      %44 = vsyncadd [#allocation6], 0
      %s45 = sshll.u32 %s3, 4
      %s46 = int_to_ptr.hbm [resolvable:$true] %s45
      %s47 = sshll.u32 [#allocation7], 4
      %s48 = int_to_ptr.vmem [resolvable:$true] %s47
      %53 = dma.hbm_to_vmem [thread:$0]  %s46, 1024, %s48, [#allocation6], 64, 64, 4
    $region17: #{forward.1} parent=1 // pred_fallthru
      _
    // Predicated region
    $region18: #{forward.1} parent=1 // pred_check
      _
    $region19: #{forward.1} parent=1 // pred_check_branch
      %55 = sbr.rel (0) target = $region21
    $region20: #{forward.1} parent=1 // pred_region
      _
    $region21: #{forward.1} parent=1 // pred_fallthru
      _
    // Predicated region
    $region22: #{forward.1} parent=1 // pred_check
      _
    $region23: #{forward.1} parent=1 // pred_check_branch
      %57 = sbr.rel (0) target = $region25
    $region24: #{forward.1} parent=1 // pred_region
      %59 = dma.done [#allocation3], 1024
    $region25: #{forward.1} parent=1 // pred_fallthru
      _
    // Predicated region
    $region26: #{forward.1} parent=1 // pred_check
      _
    $region27: #{forward.1} parent=1 // pred_check_branch
      %61 = sbr.rel (0) target = $region29
    $region28: #{forward.1} parent=1 // pred_region
      %63 = dma.done [#allocation6], 1024
    $region29: #{forward.1} parent=1 // pred_fallthru
      _
    // Predicated region
    $region30: #{forward.1} parent=1 // pred_check
      _
    $region31: #{forward.1} parent=1 // pred_check_branch
      %65 = sbr.rel (0) target = $region33
    $region32: #{forward.1} parent=1 // pred_region
      %67 = dma.done [#allocation6], 1024
    $region33: #{forward.1} parent=1 // pred_fallthru
      _
    %v68 = vld [vmem:[%s4] sm:$0x1]
    %v69 = vld [vmem:[%s4 + $0x1] sm:$0x1]
    %v70 = vld [vmem:[%s4 + $0x2] sm:$0x1]
    %v71 = vld [vmem:[%s4 + $0x3] sm:$0x1]
    %v72 = vld [vmem:[%s4 + $0x4] sm:$0x1]
    %v73 = vld [vmem:[%s0] sm:$0xf]
    %v74 = vld [vmem:[#allocation2] sm:$0xf]
    %v75 = vld [vmem:[#allocation2 + $0x4] sm:$0xf]
    %v76 = vld [vmem:[#allocation2 + $0x8] sm:$0xf]
    %v77 = vld [vmem:[#allocation2 + $0xc] sm:$0xf]
    %v78 = vld [vmem:[#allocation2 + $0x10] sm:$0xf]
    %v79 = vld [vmem:[#allocation2 + $0x14] sm:$0xf]
    %v80 = vld [vmem:[#allocation2 + $0x18] sm:$0xf]
    %v81 = vld [vmem:[#allocation2 + $0x1c] sm:$0xf]
    %v82 = vld [vmem:[#allocation2 + $0x20] sm:$0xf]
    %v83 = vld [vmem:[#allocation2 + $0x24] sm:$0xf]
    %v84 = vld [vmem:[#allocation2 + $0x28] sm:$0xf]
    %v85 = vld [vmem:[#allocation2 + $0x2c] sm:$0xf]
    %v86 = vld [vmem:[#allocation2 + $0x30] sm:$0xf]
    %v87 = vld [vmem:[#allocation2 + $0x34] sm:$0xf]
    %v88 = vld [vmem:[#allocation2 + $0x38] sm:$0xf]
    %v89 = vld [vmem:[#allocation2 + $0x3c] sm:$0xf]
    %v106 = vunpack.c.l.b16 %v74
    %v107 = vunpack.c.l.b16 %v75
    %v108 = vunpack.c.l.b16 %v76
    %v109 = vunpack.c.l.b16 %v77
    %v110 = vunpack.c.l.b16 %v78
    %v111 = vunpack.c.l.b16 %v79
    %v112 = vunpack.c.l.b16 %v80
    %v113 = vunpack.c.l.b16 %v81
    %v114 = vunpack.c.l.b16 %v82
    %v115 = vunpack.c.l.b16 %v83
    %v116 = vunpack.c.l.b16 %v84
    %v117 = vunpack.c.l.b16 %v85
    %v118 = vunpack.c.l.b16 %v86
    %v119 = vunpack.c.l.b16 %v87
    %v120 = vunpack.c.l.b16 %v88
    %v121 = vunpack.c.l.b16 %v89
    %v122 = vpack.c.b16 %v107, %v106
    %v123 = vpack.c.b16 %v109, %v108
    %v124 = vpack.c.b16 %v111, %v110
    %v125 = vpack.c.b16 %v113, %v112
    %v126 = vpack.c.b16 %v115, %v114
    %v127 = vpack.c.b16 %v117, %v116
    %v128 = vpack.c.b16 %v119, %v118
    %v129 = vpack.c.b16 %v121, %v120
    %138 = vmatpush.bf16.msra.mxu0 %v129
    %139 = vmatpush.bf16.msra.mxu0 %v128
    %140 = vmatpush.bf16.msra.mxu0 %v127
    %141 = vmatpush.bf16.msra.mxu0 %v126
    %142 = vmatpush.bf16.msra.mxu0 %v125
    %143 = vmatpush.bf16.msra.mxu0 %v124
    %144 = vmatpush.bf16.msra.mxu0 %v123
    %145 = vmatpush.bf16.msra.mxu0 %v122
    %146 = vmatmul.bf16.gmra.mxu0 %v73
    %v147 = vpop.f32.mrf.mxu0
    %v148 = vadd.f32 0.0, %v147
    %v149 = vpop.f32.mrf.mxu0
    %150 = vdwg.mxu0
    %v151 = vrot.slane %v148, 4
    %v152 = vadd.f32 %v148, %v151
    %v153 = vrot.slane %v152, 2
    %v154 = vadd.f32 %v152, %v153
    %v155 = vrot.slane %v154, 1
    %v156 = vadd.f32 %v154, %v155
    %v157 = vrcp.pop 8.0
    %v158 = vmul.f32 8.0, %v157
    %v159 = vsub.f32 1.0, %v158
    %v160 = vmul.f32 %v157, %v159
    %v161 = vadd.f32 %v157, %v160
    %vm162 = vweird.f32 %v157
    %v163 = vsel %vm162, %v157, %v161
    %v164 = vmul.f32 %v156, %v163
    %v165 = vmul.f32 %v148, %v148
    %v166 = vrot.slane %v165, 4
    %v167 = vadd.f32 %v165, %v166
    %v168 = vrot.slane %v167, 2
    %v169 = vadd.f32 %v167, %v168
    %v170 = vrot.slane %v169, 1
    %v171 = vadd.f32 %v169, %v170
    %v172 = vmul.f32 %v171, %v163
    %v173 = vmul.f32 %v164, %v164
    %v174 = vsub.f32 %v172, %v173
    %v175 = vmax.f32 %v174, 0.0
    %v176 = vadd.f32 %v175, 1e-05
    %v177 = vrsqrt.pop %v176
    %v178 = vmul.f32 %v177, %v176
    %v179 = vmul.f32 %v178, %v177
    %v180 = vmul.f32 0.5, %v179
    %v181 = vsub.f32 1.5, %v180
    %v182 = vmul.f32 %v177, %v181
    %vm183 = vweird.f32 %v176
    %vm184 = vweird.f32 %v177
    %vm185 = vmor %vm183, %vm184
    %v186 = vsel %vm185, %v177, %v182
    %v187 = vmul.f32 %v68, %v186
    %v188 = vmul.f32 %v164, %v187
    %v189 = vsub.f32 %v69, %v188
    %v190 = vperm.slane %v187, 0
    %v191 = vmul.f32 %v148, %v190
    %v192 = vperm.slane %v189, 0
    %v193 = vadd.f32 %v191, %v192
    %v194 = vmax.f32 %v193, 0.0
    %v195 = vpack.c.bf16 %v194, %v194
    %v196 = vld [vmem:[#allocation5] sm:$0xf]
    %v197 = vld [vmem:[#allocation5 + $0x4] sm:$0xf]
    %v198 = vld [vmem:[#allocation5 + $0x8] sm:$0xf]
    %v199 = vld [vmem:[#allocation5 + $0xc] sm:$0xf]
    %v200 = vld [vmem:[#allocation5 + $0x10] sm:$0xf]
    %v201 = vld [vmem:[#allocation5 + $0x14] sm:$0xf]
    %v202 = vld [vmem:[#allocation5 + $0x18] sm:$0xf]
    %v203 = vld [vmem:[#allocation5 + $0x1c] sm:$0xf]
    %v204 = vld [vmem:[#allocation5 + $0x20] sm:$0xf]
    %v205 = vld [vmem:[#allocation5 + $0x24] sm:$0xf]
    %v206 = vld [vmem:[#allocation5 + $0x28] sm:$0xf]
    %v207 = vld [vmem:[#allocation5 + $0x2c] sm:$0xf]
    %v208 = vld [vmem:[#allocation5 + $0x30] sm:$0xf]
    %v209 = vld [vmem:[#allocation5 + $0x34] sm:$0xf]
    %v210 = vld [vmem:[#allocation5 + $0x38] sm:$0xf]
    %v211 = vld [vmem:[#allocation5 + $0x3c] sm:$0xf]
    %v228 = vunpack.c.l.b16 %v196
    %v229 = vunpack.c.l.b16 %v197
    %v230 = vunpack.c.l.b16 %v198
    %v231 = vunpack.c.l.b16 %v199
    %v232 = vunpack.c.l.b16 %v200
    %v233 = vunpack.c.l.b16 %v201
    %v234 = vunpack.c.l.b16 %v202
    %v235 = vunpack.c.l.b16 %v203
    %v236 = vunpack.c.l.b16 %v204
    %v237 = vunpack.c.l.b16 %v205
    %v238 = vunpack.c.l.b16 %v206
    %v239 = vunpack.c.l.b16 %v207
    %v240 = vunpack.c.l.b16 %v208
    %v241 = vunpack.c.l.b16 %v209
    %v242 = vunpack.c.l.b16 %v210
    %v243 = vunpack.c.l.b16 %v211
    %v244 = vpack.c.b16 %v229, %v228
    %v245 = vpack.c.b16 %v231, %v230
    %v246 = vpack.c.b16 %v233, %v232
    %v247 = vpack.c.b16 %v235, %v234
    %v248 = vpack.c.b16 %v237, %v236
    %v249 = vpack.c.b16 %v239, %v238
    %v250 = vpack.c.b16 %v241, %v240
    %v251 = vpack.c.b16 %v243, %v242
    %260 = vmatpush.bf16.msra.mxu0 %v251
    %261 = vmatpush.bf16.msra.mxu0 %v250
    %262 = vmatpush.bf16.msra.mxu0 %v249
    %263 = vmatpush.bf16.msra.mxu0 %v248
    %264 = vmatpush.bf16.msra.mxu0 %v247
    %265 = vmatpush.bf16.msra.mxu0 %v246
    %266 = vmatpush.bf16.msra.mxu0 %v245
    %267 = vmatpush.bf16.msra.mxu0 %v244
    %268 = vmatmul.bf16.gmra.mxu0 %v195
    %v269 = vpop.f32.mrf.mxu0
    %v270 = vadd.f32 0.0, %v269
    %v271 = vpop.f32.mrf.mxu0
    %272 = vdwg.mxu0
    %v273 = vrot.slane %v270, 4
    %v274 = vadd.f32 %v270, %v273
    %v275 = vrot.slane %v274, 2
    %v276 = vadd.f32 %v274, %v275
    %v277 = vrot.slane %v276, 1
    %v278 = vadd.f32 %v276, %v277
    %v279 = vmul.f32 %v278, %v163
    %v280 = vmul.f32 %v270, %v270
    %v281 = vrot.slane %v280, 4
    %v282 = vadd.f32 %v280, %v281
    %v283 = vrot.slane %v282, 2
    %v284 = vadd.f32 %v282, %v283
    %v285 = vrot.slane %v284, 1
    %v286 = vadd.f32 %v284, %v285
    %v287 = vmul.f32 %v286, %v163
    %v288 = vmul.f32 %v279, %v279
    %v289 = vsub.f32 %v287, %v288
    %v290 = vmax.f32 %v289, 0.0
    %v291 = vadd.f32 %v290, 1e-05
    %v292 = vrsqrt.pop %v291
    %v293 = vmul.f32 %v292, %v291
    %v294 = vmul.f32 %v293, %v292
    %v295 = vmul.f32 0.5, %v294
    %v296 = vsub.f32 1.5, %v295
    %v297 = vmul.f32 %v292, %v296
    %vm298 = vweird.f32 %v291
    %vm299 = vweird.f32 %v292
    %vm300 = vmor %vm298, %vm299
    %v301 = vsel %vm300, %v292, %v297
    %v302 = vmul.f32 %v70, %v301
    %v303 = vmul.f32 %v279, %v302
    %v304 = vsub.f32 %v71, %v303
    %v305 = vperm.slane %v302, 0
    %v306 = vmul.f32 %v270, %v305
    %v307 = vperm.slane %v304, 0
    %v308 = vadd.f32 %v306, %v307
    %v309 = vmax.f32 %v308, 0.0
    %v310 = vpack.c.bf16 %v309, %v309
    %v311 = vld [vmem:[#allocation7] sm:$0xf]
    %v312 = vld [vmem:[#allocation7 + $0x4] sm:$0xf]
    %v313 = vld [vmem:[#allocation7 + $0x8] sm:$0xf]
    %v314 = vld [vmem:[#allocation7 + $0xc] sm:$0xf]
    %v315 = vld [vmem:[#allocation7 + $0x10] sm:$0xf]
    %v316 = vld [vmem:[#allocation7 + $0x14] sm:$0xf]
    %v317 = vld [vmem:[#allocation7 + $0x18] sm:$0xf]
    %v318 = vld [vmem:[#allocation7 + $0x1c] sm:$0xf]
    %v319 = vld [vmem:[#allocation7 + $0x20] sm:$0xf]
    %v320 = vld [vmem:[#allocation7 + $0x24] sm:$0xf]
    %v321 = vld [vmem:[#allocation7 + $0x28] sm:$0xf]
    %v322 = vld [vmem:[#allocation7 + $0x2c] sm:$0xf]
    %v323 = vld [vmem:[#allocation7 + $0x30] sm:$0xf]
    %v324 = vld [vmem:[#allocation7 + $0x34] sm:$0xf]
    %v325 = vld [vmem:[#allocation7 + $0x38] sm:$0xf]
    %v326 = vld [vmem:[#allocation7 + $0x3c] sm:$0xf]
    %v327 = vperm.slane %v72, 0
    %v344 = vunpack.c.l.b16 %v311
    %v345 = vunpack.c.l.b16 %v312
    %v346 = vunpack.c.l.b16 %v313
    %v347 = vunpack.c.l.b16 %v314
    %v348 = vunpack.c.l.b16 %v315
    %v349 = vunpack.c.l.b16 %v316
    %v350 = vunpack.c.l.b16 %v317
    %v351 = vunpack.c.l.b16 %v318
    %v352 = vunpack.c.l.b16 %v319
    %v353 = vunpack.c.l.b16 %v320
    %v354 = vunpack.c.l.b16 %v321
    %v355 = vunpack.c.l.b16 %v322
    %v356 = vunpack.c.l.b16 %v323
    %v357 = vunpack.c.l.b16 %v324
    %v358 = vunpack.c.l.b16 %v325
    %v359 = vunpack.c.l.b16 %v326
    %v360 = vpack.c.b16 %v345, %v344
    %v361 = vpack.c.b16 %v347, %v346
    %v362 = vpack.c.b16 %v349, %v348
    %v363 = vpack.c.b16 %v351, %v350
    %v364 = vpack.c.b16 %v353, %v352
    %v365 = vpack.c.b16 %v355, %v354
    %v366 = vpack.c.b16 %v357, %v356
    %v367 = vpack.c.b16 %v359, %v358
    %376 = vmatpush.bf16.msra.mxu0 %v367
    %377 = vmatpush.bf16.msra.mxu0 %v366
    %378 = vmatpush.bf16.msra.mxu0 %v365
    %379 = vmatpush.bf16.msra.mxu0 %v364
    %380 = vmatpush.bf16.msra.mxu0 %v363
    %381 = vmatpush.bf16.msra.mxu0 %v362
    %382 = vmatpush.bf16.msra.mxu0 %v361
    %383 = vmatpush.bf16.msra.mxu0 %v360
    %384 = vmatmul.bf16.gmra.mxu0 %v310
    %v385 = vpop.f32.mrf.mxu0
    %v386 = vadd.f32 %v327, %v385
    %v387 = vpop.f32.mrf.mxu0
    %388 = vdwg.mxu0
    %389 = vst [vmem:[#allocation8] sm:$0xff] %v386
    // Predicated region
    $region34: #{forward.1} parent=1 // pred_check
      _
    $region35: #{forward.1} parent=1 // pred_check_branch
      %391 = sbr.rel (0) target = $region37
    $region36: #{forward.1} parent=1 // pred_region
      %393 = vsyncadd [#allocation4], 0
      %s395 = sshll.u32 [#allocation8], 4
      %s396 = int_to_ptr.vmem [resolvable:$true] %s395
      %s397 = sshll.u32 %s5, 4
      %s398 = int_to_ptr.hbm [resolvable:$true] %s397
      %400 = dma.vmem_to_hbm [thread:$0]  %s396, 128, %s398, [#allocation4]
    $region37: #{forward.1} parent=1 // pred_fallthru
      _
    // Predicated region
    $region38: #{forward.1} parent=1 // pred_check
      _
    $region39: #{forward.1} parent=1 // pred_check_branch
      %402 = sbr.rel (0) target = $region41
    $region40: #{forward.1} parent=1 // pred_region
      %404 = dma.done [#allocation4], 128
    $region41: #{forward.1} parent=1 // pred_fallthru
      _
    %405 = vsyncpa [#allocation3], 1
    %406 = vsyncpa [#allocation6], 1
    %407 = vsyncpa [#allocation4], 1

</llo_original>
